<compile_context>
chip_gen: v7x
topology: tpu7x:2x2x1
jax: 0.10.0
libtpu: 0.0.40
codegen_flags: <defaults>
</compile_context>

<pallas_src>
from functools import partial

import jax
import jax.numpy as jnp
from jax import lax
from jax.experimental import pallas as pl
from jax.experimental.pallas import tpu as pltpu

_UNROLL_C_MAX = 64  # fully unroll the per-channel loops for small C


def _chan_rmsnorm_kernel(x_ref, g_ref, o_ref, *, eps_sq: float):
    # x_ref / o_ref: (C, S_TILE, 128) VMEM (batch dim squeezed out of the block).
    # g_ref: (C,) f32 in SMEM holding gamma * sqrt(C).
    C = x_ref.shape[0]
    spatial = x_ref.shape[1:]  # (S_TILE, 128)

    if C <= _UNROLL_C_MAX:
        # Pass 1: square-and-accumulate over channels in f32, per-channel upcast only
        # (no whole-block f32 temporary stays live).
        sumsq = jnp.zeros(spatial, jnp.float32)
        for c in range(C):
            xc = x_ref[c].astype(jnp.float32)
            sumsq = sumsq + xc * xc
        # rsqrt(max(sumsq, eps^2)) == 1 / max(||x||, eps); EUP rsqrt.
        inv = lax.rsqrt(jnp.maximum(sumsq, eps_sq))
        # Pass 2: re-read x per channel and scale (VMEM re-read is free; mem-bound).
        for c in range(C):
            o_ref[c] = (x_ref[c].astype(jnp.float32) * (inv * g_ref[c])).astype(o_ref.dtype)
    else:
        def acc_body(c, acc):
            xc = x_ref[c].astype(jnp.float32)
            return acc + xc * xc

        sumsq = lax.fori_loop(0, C, acc_body, jnp.zeros(spatial, jnp.float32))
        inv = lax.rsqrt(jnp.maximum(sumsq, eps_sq))

        @pl.loop(0, C)
        def _(c):
            o_ref[c] = (x_ref[c].astype(jnp.float32) * (inv * g_ref[c])).astype(o_ref.dtype)


def _choose_spatial_tile(B: int, C: int, s_full: int, dtype_bytes: int) -> int:
    """Pick S_TILE (rows of 128 lanes) for the (1, C, S_TILE, 128) block."""
    lanes = 128
    row_bytes = lanes * dtype_bytes          # bytes of one (1, 128) row
    chan_bytes = C * row_bytes               # bytes of one spatial row across all C

    # ~2 MiB input blocks hide the ~0.35us per-step overhead on v5e/v6e/v7x.
    s_tile = max(8, ((2 << 20) // chan_bytes) // 8 * 8)
    # Keep each per-channel contiguous DMA run >= ~16 KiB (large-C DMA efficiency).
    s_tile = max(s_tile, max(8, ((16 << 10) // row_bytes) // 8 * 8))

    if s_tile >= s_full:
        s_tile = s_full                       # one block spans the whole spatial axis

    # VMEM budget guard: double-buffered in+out blocks must fit ~40 MiB (v7x-safe).
    # TODO(synk): for extreme C (>~3K in f32) even the minimum (C, 8, 128) block
    # overflows this budget on v7x; that case needs a C-split onto a third
    # "arbitrary" grid axis with a two-pass accumulate-sumsq-then-normalize.
    while s_tile > 8 and 4 * C * s_tile * row_bytes > (40 << 20):
        s_tile = max(8, (s_tile // 2) // 8 * 8)

    # Ensure enough grid steps for v7x's two TensorCores and DMA/compute overlap.
    while B * pl.cdiv(s_full, s_tile) < 8:
        nxt = (s_tile // 2) // 8 * 8
        if nxt < 8:
            break
        s_tile = nxt
    return s_tile


def chan_rmsnorm(x: jax.Array, gamma: jax.Array, eps: float = 1e-12) -> jax.Array:
    """x: (B, C, H, W). gamma: (C,), (C,1,1) or (1,C,1,1). Returns (B, C, H, W)."""
    B, C, H, W = x.shape
    HW = H * W
    dtype_bytes = jnp.dtype(x.dtype).itemsize
    lanes = 128

    # Lane-dense view (B, C, S, 128). Pad ONLY the HW%128 remainder (no pad at all in
    # the common case HW % 128 == 0); never pad the spatial axis to the tile size.
    s_full = pl.cdiv(HW, lanes)
    hw_pad = s_full * lanes
    x2 = x.reshape(B, C, HW)
    if hw_pad != HW:
        x2 = jnp.pad(x2, ((0, 0), (0, 0), (0, hw_pad - HW)))
    x4 = x2.reshape(B, C, s_full, lanes)

    # gamma * sqrt(C) as C scalars in SMEM.
    g = (gamma.reshape(C).astype(jnp.float32)) * (float(C) ** 0.5)

    s_tile = _choose_spatial_tile(B, C, s_full, dtype_bytes)
    grid = (B, pl.cdiv(s_full, s_tile))

    # Explicit VMEM limit: 2x in + 2x out double buffers + small f32 working set,
    # floored at 32 MiB and capped at 48 MiB (<= v7x 64 MiB physical; v5e scoped
    # default is only 16 MiB so we must raise it explicitly).
    block_bytes = C * s_tile * lanes * dtype_bytes
    est = 4 * block_bytes + 6 * s_tile * lanes * 4 + (2 << 20)
    vmem_limit = int(min(max(est, 32 << 20), 48 << 20))

    cost = pl.CostEstimate(
        flops=4 * B * C * s_full * lanes,
        transcendentals=B * s_full * lanes,
        bytes_accessed=2 * B * C * s_full * lanes * dtype_bytes + C * 4,
    )

    out4 = pl.pallas_call(
        partial(_chan_rmsnorm_kernel, eps_sq=eps * eps),
        out_shape=jax.ShapeDtypeStruct((B, C, s_full, lanes), x.dtype),
        grid_spec=pltpu.PrefetchScalarGridSpec(
            num_scalar_prefetch=0,
            grid=grid,
            in_specs=[
                pl.BlockSpec((None, C, s_tile, lanes), lambda b, s: (b, 0, s, 0)),
                pl.BlockSpec(memory_space=pltpu.MemorySpace.SMEM),
            ],
            out_specs=pl.BlockSpec((None, C, s_tile, lanes), lambda b, s: (b, 0, s, 0)),
        ),
        compiler_params=pltpu.CompilerParams(
            dimension_semantics=("parallel", "parallel"),
            vmem_limit_bytes=vmem_limit,
        ),
        cost_estimate=cost,
    )(x4, g)

    out = out4.reshape(B, C, hw_pad)
    if hw_pad != HW:
        out = out[:, :, :HW]
    return out.reshape(B, C, H, W)


def _reference(x, gamma):
    C = x.shape[1]
    norm = jnp.sqrt(jnp.sum(x.astype(jnp.float32) ** 2, axis=1, keepdims=True))
    return (x / jnp.maximum(norm, 1e-12) * (C ** 0.5) * gamma.reshape(1, C, 1, 1)).astype(x.dtype)


if __name__ == "__main__":
    key = jax.random.PRNGKey(0)

    # Main check: module-sized shapes (HW % 128 == 0 -> no pad/slice, pure kernel).
    B, C, H, W = 2, 4, 16, 16
    x = jax.random.normal(key, (B, C, H, W), dtype=jnp.float32)
    gamma = jnp.ones((C, 1, 1), dtype=jnp.float32)   # nn.Parameter(torch.ones(dim,1,1))
    y = jax.block_until_ready(chan_rmsnorm(x, gamma))
    assert y.shape == x.shape and y.dtype == x.dtype
    assert jnp.allclose(y, _reference(x, gamma), atol=1e-5, rtol=1e-5), "mismatch (case 1)"

    # Second check: B=1 with a spatial extent that does not divide the tile, exercising
    # the min-grid-steps shrink and Pallas' ragged last-block masking.
    B2, C2, H2, W2 = 1, 4, 48, 48
    x2 = jax.random.normal(jax.random.PRNGKey(1), (B2, C2, H2, W2), dtype=jnp.float32)
    gamma2 = 0.5 + jax.random.uniform(jax.random.PRNGKey(2), (C2, 1, 1), dtype=jnp.float32)
    y2 = jax.block_until_ready(chan_rmsnorm(x2, gamma2))
    assert y2.shape == x2.shape and y2.dtype == x2.dtype
    assert jnp.allclose(y2, _reference(x2, gamma2), atol=1e-5, rtol=1e-5), "mismatch (case 2)"

    print("KERNEL_OK")
</pallas_src>

<mosaic_0001>
module attributes {stable_mosaic.version = 11 : i64} {
  func.func @_chan_rmsnorm_kernel(%arg0: i32, %arg1: i32, %arg2: memref<1x4x2x128xf32, #tpu.memory_space<vmem>>, %arg3: memref<4xf32, #tpu.memory_space<smem>>, %arg4: memref<1x4x2x128xf32, #tpu.memory_space<vmem>>) attributes {dimension_semantics = [#tpu.dimension_semantics<parallel>, #tpu.dimension_semantics<parallel>], iteration_bounds = array<i64: 2, 1>, scalar_prefetch = 0 : i64, scratch_operands = 0 : i64, tpu.core_type = #tpu.core_type<tc>, window_params = [{transform_indices = @transform_0, window_bounds = array<i64: 1, 4, 2, 128>}, {transform_indices = @transform_1, window_bounds = array<i64: 4>}, {transform_indices = @transform_2, window_bounds = array<i64: 1, 4, 2, 128>}]} {
    %cst = arith.constant 0.000000e+00 : f32
    %0 = vector.broadcast %cst : f32 to vector<2x128xf32>
    %c0 = arith.constant 0 : index
    %c0_0 = arith.constant 0 : index
    %c0_1 = arith.constant 0 : index
    %c0_2 = arith.constant 0 : index
    %1 = vector.load %arg2[%c0, %c0_0, %c0_1, %c0_2] : memref<1x4x2x128xf32, #tpu.memory_space<vmem>>, vector<1x1x2x128xf32>
    %2 = vector.shape_cast %1 : vector<1x1x2x128xf32> to vector<2x128xf32>
    %3 = arith.mulf %2, %2 : vector<2x128xf32>
    %4 = arith.addf %0, %3 : vector<2x128xf32>
    %c0_3 = arith.constant 0 : index
    %c1 = arith.constant 1 : index
    %c0_4 = arith.constant 0 : index
    %c0_5 = arith.constant 0 : index
    %5 = vector.load %arg2[%c0_3, %c1, %c0_4, %c0_5] : memref<1x4x2x128xf32, #tpu.memory_space<vmem>>, vector<1x1x2x128xf32>
    %6 = vector.shape_cast %5 : vector<1x1x2x128xf32> to vector<2x128xf32>
    %7 = arith.mulf %6, %6 : vector<2x128xf32>
    %8 = arith.addf %4, %7 : vector<2x128xf32>
    %c0_6 = arith.constant 0 : index
    %c2 = arith.constant 2 : index
    %c0_7 = arith.constant 0 : index
    %c0_8 = arith.constant 0 : index
    %9 = vector.load %arg2[%c0_6, %c2, %c0_7, %c0_8] : memref<1x4x2x128xf32, #tpu.memory_space<vmem>>, vector<1x1x2x128xf32>
    %10 = vector.shape_cast %9 : vector<1x1x2x128xf32> to vector<2x128xf32>
    %11 = arith.mulf %10, %10 : vector<2x128xf32>
    %12 = arith.addf %8, %11 : vector<2x128xf32>
    %c0_9 = arith.constant 0 : index
    %c3 = arith.constant 3 : index
    %c0_10 = arith.constant 0 : index
    %c0_11 = arith.constant 0 : index
    %13 = vector.load %arg2[%c0_9, %c3, %c0_10, %c0_11] : memref<1x4x2x128xf32, #tpu.memory_space<vmem>>, vector<1x1x2x128xf32>
    %14 = vector.shape_cast %13 : vector<1x1x2x128xf32> to vector<2x128xf32>
    %15 = arith.mulf %14, %14 : vector<2x128xf32>
    %16 = arith.addf %12, %15 : vector<2x128xf32>
    %cst_12 = arith.constant 1.000000e-24 : f32
    %17 = vector.broadcast %cst_12 : f32 to vector<2x128xf32>
    %18 = arith.maximumf %16, %17 : vector<2x128xf32>
    %19 = math.rsqrt %18 : vector<2x128xf32>
    %c0_13 = arith.constant 0 : index
    %c0_14 = arith.constant 0 : index
    %c0_15 = arith.constant 0 : index
    %c0_16 = arith.constant 0 : index
    %20 = vector.load %arg2[%c0_13, %c0_14, %c0_15, %c0_16] : memref<1x4x2x128xf32, #tpu.memory_space<vmem>>, vector<1x1x2x128xf32>
    %21 = vector.shape_cast %20 : vector<1x1x2x128xf32> to vector<2x128xf32>
    %c0_17 = arith.constant 0 : index
    %22 = memref.load %arg3[%c0_17] : memref<4xf32, #tpu.memory_space<smem>>
    %23 = vector.broadcast %22 : f32 to vector<2x128xf32>
    %24 = arith.mulf %19, %23 : vector<2x128xf32>
    %25 = arith.mulf %21, %24 : vector<2x128xf32>
    %c0_18 = arith.constant 0 : index
    %c0_19 = arith.constant 0 : index
    %c0_20 = arith.constant 0 : index
    %c0_21 = arith.constant 0 : index
    %26 = vector.load %arg4[%c0_18, %c0_19, %c0_20, %c0_21] : memref<1x4x2x128xf32, #tpu.memory_space<vmem>>, vector<1x1x2x128xf32>
    %27 = vector.shape_cast %26 : vector<1x1x2x128xf32> to vector<2x128xf32>
    %28 = vector.shape_cast %25 : vector<2x128xf32> to vector<1x1x2x128xf32>
    tpu.vector_store %arg4[%c0_18, %c0_19, %c0_20, %c0_21], %28 {strides = array<i32>} : memref<1x4x2x128xf32, #tpu.memory_space<vmem>>, vector<1x1x2x128xf32>,
    %c0_22 = arith.constant 0 : index
    %c1_23 = arith.constant 1 : index
    %c0_24 = arith.constant 0 : index
    %c0_25 = arith.constant 0 : index
    %29 = vector.load %arg2[%c0_22, %c1_23, %c0_24, %c0_25] : memref<1x4x2x128xf32, #tpu.memory_space<vmem>>, vector<1x1x2x128xf32>
    %30 = vector.shape_cast %29 : vector<1x1x2x128xf32> to vector<2x128xf32>
    %c1_26 = arith.constant 1 : index
    %31 = memref.load %arg3[%c1_26] : memref<4xf32, #tpu.memory_space<smem>>
    %32 = vector.broadcast %31 : f32 to vector<2x128xf32>
    %33 = arith.mulf %19, %32 : vector<2x128xf32>
    %34 = arith.mulf %30, %33 : vector<2x128xf32>
    %c0_27 = arith.constant 0 : index
    %c1_28 = arith.constant 1 : index
    %c0_29 = arith.constant 0 : index
    %c0_30 = arith.constant 0 : index
    %35 = vector.load %arg4[%c0_27, %c1_28, %c0_29, %c0_30] : memref<1x4x2x128xf32, #tpu.memory_space<vmem>>, vector<1x1x2x128xf32>
    %36 = vector.shape_cast %35 : vector<1x1x2x128xf32> to vector<2x128xf32>
    %37 = vector.shape_cast %34 : vector<2x128xf32> to vector<1x1x2x128xf32>
    tpu.vector_store %arg4[%c0_27, %c1_28, %c0_29, %c0_30], %37 {strides = array<i32>} : memref<1x4x2x128xf32, #tpu.memory_space<vmem>>, vector<1x1x2x128xf32>,
    %c0_31 = arith.constant 0 : index
    %c2_32 = arith.constant 2 : index
    %c0_33 = arith.constant 0 : index
    %c0_34 = arith.constant 0 : index
    %38 = vector.load %arg2[%c0_31, %c2_32, %c0_33, %c0_34] : memref<1x4x2x128xf32, #tpu.memory_space<vmem>>, vector<1x1x2x128xf32>
    %39 = vector.shape_cast %38 : vector<1x1x2x128xf32> to vector<2x128xf32>
    %c2_35 = arith.constant 2 : index
    %40 = memref.load %arg3[%c2_35] : memref<4xf32, #tpu.memory_space<smem>>
    %41 = vector.broadcast %40 : f32 to vector<2x128xf32>
    %42 = arith.mulf %19, %41 : vector<2x128xf32>
    %43 = arith.mulf %39, %42 : vector<2x128xf32>
    %c0_36 = arith.constant 0 : index
    %c2_37 = arith.constant 2 : index
    %c0_38 = arith.constant 0 : index
    %c0_39 = arith.constant 0 : index
    %44 = vector.load %arg4[%c0_36, %c2_37, %c0_38, %c0_39] : memref<1x4x2x128xf32, #tpu.memory_space<vmem>>, vector<1x1x2x128xf32>
    %45 = vector.shape_cast %44 : vector<1x1x2x128xf32> to vector<2x128xf32>
    %46 = vector.shape_cast %43 : vector<2x128xf32> to vector<1x1x2x128xf32>
    tpu.vector_store %arg4[%c0_36, %c2_37, %c0_38, %c0_39], %46 {strides = array<i32>} : memref<1x4x2x128xf32, #tpu.memory_space<vmem>>, vector<1x1x2x128xf32>,
    %c0_40 = arith.constant 0 : index
    %c3_41 = arith.constant 3 : index
    %c0_42 = arith.constant 0 : index
    %c0_43 = arith.constant 0 : index
    %47 = vector.load %arg2[%c0_40, %c3_41, %c0_42, %c0_43] : memref<1x4x2x128xf32, #tpu.memory_space<vmem>>, vector<1x1x2x128xf32>
    %48 = vector.shape_cast %47 : vector<1x1x2x128xf32> to vector<2x128xf32>
    %c3_44 = arith.constant 3 : index
    %49 = memref.load %arg3[%c3_44] : memref<4xf32, #tpu.memory_space<smem>>
    %50 = vector.broadcast %49 : f32 to vector<2x128xf32>
    %51 = arith.mulf %19, %50 : vector<2x128xf32>
    %52 = arith.mulf %48, %51 : vector<2x128xf32>
    %c0_45 = arith.constant 0 : index
    %c3_46 = arith.constant 3 : index
    %c0_47 = arith.constant 0 : index
    %c0_48 = arith.constant 0 : index
    %53 = vector.load %arg4[%c0_45, %c3_46, %c0_47, %c0_48] : memref<1x4x2x128xf32, #tpu.memory_space<vmem>>, vector<1x1x2x128xf32>
    %54 = vector.shape_cast %53 : vector<1x1x2x128xf32> to vector<2x128xf32>
    %55 = vector.shape_cast %52 : vector<2x128xf32> to vector<1x1x2x128xf32>
    tpu.vector_store %arg4[%c0_45, %c3_46, %c0_47, %c0_48], %55 {strides = array<i32>} : memref<1x4x2x128xf32, #tpu.memory_space<vmem>>, vector<1x1x2x128xf32>,
    return
  }
  func.func @transform_0(%arg0: i32, %arg1: i32) -> (i32, i32, i32, i32) {
    %c0_i32 = arith.constant 0 : i32
    %c0_i32_0 = arith.constant 0 : i32
    %c0_i32_1 = arith.constant 0 : i32
    return %arg0, %c0_i32, %arg1, %c0_i32_0 : i32, i32, i32, i32
  }
  func.func @transform_1(%arg0: i32, %arg1: i32) -> i32 {
    %c0_i32 = arith.constant 0 : i32
    %c0_i32_0 = arith.constant 0 : i32
    return %c0_i32 : i32
  }
  func.func @transform_2(%arg0: i32, %arg1: i32) -> (i32, i32, i32, i32) {
    %c0_i32 = arith.constant 0 : i32
    %c0_i32_0 = arith.constant 0 : i32
    %c0_i32_1 = arith.constant 0 : i32
    return %arg0, %c0_i32, %arg1, %c0_i32_0 : i32, i32, i32, i32
  }
}

</mosaic_0001>

<llo_original>
// kernel: tpu_custom_call.1
$region0: #{tpu_custom_call.1}
  #allocation0 [shape = 'u32[]', space=smem, size = 0x4, offset = 0x4, fixed_abs, tag = 'smem constant byte address 0x4 - core index']
  #allocation1 [shape = 'u32[144,128]{1,0:T(1,128)}', space=vmem, size = 0x12000, scoped, tag = 'internal scratch']
  %s0 = inlined_call_operand.hbm [shape: f32[2,4,2,128], index: 0, kind: input, shape index: {}]
  %s1 = inlined_call_operand.vmem [shape: f32[4], index: 1, kind: input, shape index: {}]
  %s2 = inlined_call_operand.hbm [shape: f32[2,4,2,128], index: 2, kind: output, shape index: {}]
  %s3 = sld [smem:[#allocation0]]
  $region49: #{tpu_custom_call.1} parent=0
    _
  %s5 = ssub.s32 1, %s3
  %s6 = scalar_select 0, %s5, %s3
  $region1: #{tpu_custom_call.1} parent=0
    #allocation2 [shape = 'u8[8192]{0}', space=vmem, size = 0x2000, scoped, tag = 'input window, operand 0']
    #allocation3 [shape = 's32[2]{0}', space=sflag, size = 0x8, scoped, tag = 'scoped memory for tpu_custom_call.1']
    #allocation4 [shape = 's32[2]{0}', space=sflag, size = 0x8, scoped, tag = 'scoped memory for tpu_custom_call.1']
    #allocation5 [shape = 's32[2]{0}', space=sflag, size = 0x8, scoped, tag = 'scoped memory for tpu_custom_call.1']
    #allocation6 [shape = 'u8[512]{0}', space=smem, size = 0x200, scoped, tag = 'input window, operand 1, single buffered']
    #allocation7 [shape = 'u8[8192]{0}', space=vmem, size = 0x2000, scoped, tag = 'output window, operand 0']
    %7 = vsyncpa [#allocation3], 0
    %s8 = scalar_lea.sflag [#allocation3], 1
    %9 = vsyncpa %s8, 0
    %10 = vsyncpa [#allocation5], 0
    %11 = vsyncpa [#allocation4], 0
    %s12 = scalar_lea.sflag [#allocation4], 1
    %13 = vsyncpa %s12, 0
    loop: start=0, step=1, limit=4
    $region2: #{tpu_custom_call.1} parent=1 // loop_pre_header
      _
    $region3: #{tpu_custom_call.1} parent=1 // loop_header
      %s15 = sphi 0, %s19
      %p16 = scmp.ge.s32.totalorder %s15, 4
      %s22 = sphi 0, %s34
      %s23 = sphi 0, %s30
      %s24 = sphi 0, %s22
      %s25 = sphi 0, %s23
      %s26 = sphi 0, %s24
      %s27 = sphi 0, %s25
      %s39 = sphi 0, %s41
      %s42 = sphi 0, %s39
      %s43 = sphi 0, %s42
      %s59 = sphi 0, %s43
      %s63 = sphi 0, %s63
      %s65 = sphi 0, %s63
      %s66 = sphi 0, %s65
      %s80 = sphi 0, %s66
      %s88 = sphi 0, %s90
      %s91 = sphi 0, %s88
      %s92 = sphi 0, %s91
      %s108 = sphi 0, %s92
    $region4: #{tpu_custom_call.1} parent=1 // loop_header_branch
      %18 = sbr.rel (%p16) target = $region8
    $region5: #{tpu_custom_call.1} parent=1 // loop_body
      %s20 = ssub.s32 %s15, 1
      %s21 = ssub.s32 %s15, 2
      %s28 = sadd.s32 1, %s23
      %p29 = scmp.ge.s32.totalorder %s28, 1
      %s30 = scalar_select %p29, 0, %s28
      %s31 = sadd.s32 1, %s22
      %s32 = scalar_select %p29, %s31, %s22
      %p33 = scmp.ge.s32.totalorder %s32, 2
      %s34 = scalar_select %p33, 0, %s32
      %s35 = ssub.s32 %s22, %s34
      %s36 = ssub.s32 %s23, %s30
      %s37 = sor.u32 %s35, %s36
      %p38 = scmp.eq.s32.totalorder %s37, 0
      %s40 = sadd.s32 %s39, 1
      %s41 = scalar_select %p38, %s39, %s40
      %p44 = pneg %p38
      %p45 = scmp.eq.s32.totalorder %s15, 1
      %p46 = por %p44, %p45
      %p47 = scmp.ne.s32.totalorder %s39, %s42
      %p48 = scmp.eq.s32.totalorder %s15, 0
      %p49 = por %p47, %p48
      %p50 = scmp.ne.s32.totalorder %s39, %s42
      %p51 = scmp.eq.s32.totalorder %s20, 1
      %p52 = por %p50, %p51
      %p53 = scmp.ne.s32.totalorder %s42, %s43
      %p54 = scmp.eq.s32.totalorder %s20, 0
      %p55 = por %p53, %p54
      %p56 = scmp.ne.s32.totalorder %s42, %s43
      %p57 = scmp.eq.s32.totalorder %s21, 1
      %p58 = por %p56, %p57
      %p60 = scmp.ne.s32.totalorder %s43, %s59
      %p61 = scmp.eq.s32.totalorder %s21, 0
      %p62 = por %p60, %p61
      %s64 = sadd.s32 %s63, 1
      %p67 = scmp.eq.s32.totalorder %s15, 1
      %p68 = scmp.ne.s32.totalorder %s63, %s65
      %p69 = scmp.eq.s32.totalorder %s15, 0
      %p70 = por %p68, %p69
      %p71 = scmp.ne.s32.totalorder %s63, %s65
      %p72 = scmp.eq.s32.totalorder %s20, 1
      %p73 = por %p71, %p72
      %p74 = scmp.ne.s32.totalorder %s65, %s66
      %p75 = scmp.eq.s32.totalorder %s20, 0
      %p76 = por %p74, %p75
      %p77 = scmp.ne.s32.totalorder %s65, %s66
      %p78 = scmp.eq.s32.totalorder %s21, 1
      %p79 = por %p77, %p78
      %p81 = scmp.ne.s32.totalorder %s66, %s80
      %p82 = scmp.eq.s32.totalorder %s21, 0
      %p83 = por %p81, %p82
      %s84 = ssub.s32 %s22, %s34
      %s85 = ssub.s32 %s23, %s30
      %s86 = sor.u32 %s84, %s85
      %p87 = scmp.eq.s32.totalorder %s86, 0
      %s89 = sadd.s32 %s88, 1
      %s90 = scalar_select %p87, %s88, %s89
      %p93 = pneg %p87
      %p94 = scmp.eq.s32.totalorder %s15, 1
      %p95 = por %p93, %p94
      %p96 = scmp.ne.s32.totalorder %s88, %s91
      %p97 = scmp.eq.s32.totalorder %s15, 0
      %p98 = por %p96, %p97
      %p99 = scmp.ne.s32.totalorder %s88, %s91
      %p100 = scmp.eq.s32.totalorder %s20, 1
      %p101 = por %p99, %p100
      %p102 = scmp.ne.s32.totalorder %s91, %s92
      %p103 = scmp.eq.s32.totalorder %s20, 0
      %p104 = por %p102, %p103
      %p105 = scmp.ne.s32.totalorder %s91, %s92
      %p106 = scmp.eq.s32.totalorder %s21, 1
      %p107 = por %p105, %p106
      %p109 = scmp.ne.s32.totalorder %s92, %s108
      %p110 = scmp.eq.s32.totalorder %s21, 0
      %p111 = por %p109, %p110
      %p112 = scmp.le.s32.totalorder 1, %s15
      %p113 = scmp.lt.s32.totalorder %s15, 3
      %p114 = pnand %p112, %p113
      %p115 = pneg %p114
      // Predicated region
      $region9: #{tpu_custom_call.1} parent=5 // pred_check
        _
      $region10: #{tpu_custom_call.1} parent=5 // pred_check_branch
        %117 = sbr.rel (%p114) target = $region12
      $region11: #{tpu_custom_call.1} parent=5 // pred_region
        %s118 = ssub.s32 %s15, 1
        // Predicated region
        $region13: #{tpu_custom_call.1} parent=11 // pred_check
          %p119 = pneg %p76
        $region14: #{tpu_custom_call.1} parent=11 // pred_check_branch
          %121 = sbr.rel (%p119) target = $region16
        $region15: #{tpu_custom_call.1} parent=11 // pred_region
          %s123 = ssub.s32 16, 16
          %124 = vsyncadd [#allocation5], %s123
          %s126 = sshll.u32 %s1, 4
          %s127 = int_to_ptr.vmem [resolvable:$true] %s126
          %129 = dma.vmem_to_smem %s127, 16, [#allocation6], [#allocation5]
        $region16: #{tpu_custom_call.1} parent=11 // pred_fallthru
          _
      $region12: #{tpu_custom_call.1} parent=5 // pred_fallthru
        _
      %p130 = scmp.lt.s32.totalorder %s15, 2
      // Predicated region
      $region17: #{tpu_custom_call.1} parent=5 // pred_check
        %p131 = pneg %p130
      $region18: #{tpu_custom_call.1} parent=5 // pred_check_branch
        %133 = sbr.rel (%p131) target = $region20
      $region19: #{tpu_custom_call.1} parent=5 // pred_region
        // Predicated region
        $region21: #{tpu_custom_call.1} parent=19 // pred_check
          %p134 = pneg %p49
        $region22: #{tpu_custom_call.1} parent=19 // pred_check_branch
          %136 = sbr.rel (%p134) target = $region24
        $region23: #{tpu_custom_call.1} parent=19 // pred_region
          %s137 = sand.u32 %s39, 1
          %s138 = scalar_lea.sflag [#allocation3], %s137
          %s139 = sand.u32 %s39, 1
          %s140 = smul.addr %s139, 8
          %s141 = scalar_lea.vmem [#allocation2], %s140
          %s143 = ssub.s32 128, 128
          %144 = vsyncadd %s138, %s143
          %s145 = smul.addr %s22, 4
          %s146 = sadd.s32 %s23, %s145
          %s147 = smul.addr %s146, 32
          %s148 = scalar_lea.hbm %s0, %s147
          %s149 = sshll.u32 %s141, 4
          %s150 = int_to_ptr.vmem [resolvable:$true] %s149
          %155 = dma.hbm_to_vmem [thread:$0]  %s148, 128, %s150, %s138, 32, 32, 2
        $region24: #{tpu_custom_call.1} parent=19 // pred_fallthru
          _
      $region20: #{tpu_custom_call.1} parent=5 // pred_fallthru
        _
      %p156 = scmp.le.s32.totalorder 1, %s15
      %p157 = scmp.lt.s32.totalorder %s15, 3
      %p158 = pnand %p156, %p157
      %p159 = pneg %p158
      // Predicated region
      $region25: #{tpu_custom_call.1} parent=5 // pred_check
        _
      $region26: #{tpu_custom_call.1} parent=5 // pred_check_branch
        %161 = sbr.rel (%p158) target = $region28
      $region27: #{tpu_custom_call.1} parent=5 // pred_region
        %s162 = ssub.s32 %s15, 1
        %s163 = sand.u32 %s42, 1
        %s164 = scalar_lea.sflag [#allocation3], %s163
        %s165 = sand.u32 %s42, 1
        %s166 = smul.addr %s165, 8
        %s167 = scalar_lea.vmem [#allocation2], %s166
        // Predicated region
        $region29: #{tpu_custom_call.1} parent=27 // pred_check
          %p168 = pneg %p55
        $region30: #{tpu_custom_call.1} parent=27 // pred_check_branch
          %170 = sbr.rel (%p168) target = $region32
        $region31: #{tpu_custom_call.1} parent=27 // pred_region
          %171 = dma.done %s164, 128
        $region32: #{tpu_custom_call.1} parent=27 // pred_fallthru
          _
        // Predicated region
        $region33: #{tpu_custom_call.1} parent=27 // pred_check
          %p172 = pneg %p76
        $region34: #{tpu_custom_call.1} parent=27 // pred_check_branch
          %174 = sbr.rel (%p172) target = $region36
        $region35: #{tpu_custom_call.1} parent=27 // pred_region
          %175 = dma.done [#allocation5], 16
        $region36: #{tpu_custom_call.1} parent=27 // pred_fallthru
          _
        %176 = sfence
        %s177 = sand.u32 %s42, 1
        %s178 = scalar_lea.sflag [#allocation3], %s177
        %s179 = sand.u32 %s42, 1
        %s180 = smul.addr %s179, 8
        %s181 = scalar_lea.vmem [#allocation2], %s180
        %p182 = pneg %p55
        %p183 = pneg %p52
        %p184 = pneg %p76
        %p185 = pneg %p73
        %p186 = pneg %p104
        %p187 = pneg %p101
        %s188 = sand.u32 %s91, 1
        %s189 = scalar_lea.sflag [#allocation4], %s188
        %s190 = sand.u32 %s91, 1
        %s191 = smul.addr %s190, 8
        %s192 = scalar_lea.vmem [#allocation7], %s191
        %v193 = vld [vmem:[%s167] sm:$0x3]
        %v194 = vmul.f32 %v193, %v193
        %v195 = vadd.f32 %v194, 0.0
        %s196 = scalar_lea.vmem %s167, 2 [#allocation2]
        %v197 = vld [vmem:[%s196] sm:$0x3]
        %v198 = vmul.f32 %v197, %v197
        %v199 = vadd.f32 %v195, %v198
        %s200 = scalar_lea.vmem %s167, 4 [#allocation2]
        %v201 = vld [vmem:[%s200] sm:$0x3]
        %v202 = vmul.f32 %v201, %v201
        %v203 = vadd.f32 %v199, %v202
        %s204 = scalar_lea.vmem %s167, 6 [#allocation2]
        %v205 = vld [vmem:[%s204] sm:$0x3]
        %v206 = vmul.f32 %v205, %v205
        %v207 = vadd.f32 %v203, %v206
        %v208 = vmax.f32 %v207, 1e-24
        %v209 = vrsqrt.pop %v208
        %s210 = sld [smem:[#allocation6]]
        %v211 = vstv %s210
        %v212 = vmul.f32 %v209, %v211
        %v213 = vmul.f32 %v193, %v212
        %214 = vst [vmem:[%s192] sm:$0x3] %v213
        %v215 = vld [vmem:[%s196] sm:$0x3]
        %s216 = sld [smem:[#allocation6 + $0x1]]
        %v217 = vstv %s216
        %v218 = vmul.f32 %v209, %v217
        %v219 = vmul.f32 %v215, %v218
        %s220 = scalar_lea.vmem %s192, 2 [#allocation7]
        %221 = vst [vmem:[%s220] sm:$0x3] %v219
        %v222 = vld [vmem:[%s200] sm:$0x3]
        %s223 = sld [smem:[#allocation6 + $0x2]]
        %v224 = vstv %s223
        %v225 = vmul.f32 %v209, %v224
        %v226 = vmul.f32 %v222, %v225
        %s227 = scalar_lea.vmem %s192, 4 [#allocation7]
        %228 = vst [vmem:[%s227] sm:$0x3] %v226
        %v229 = vld [vmem:[%s204] sm:$0x3]
        %s230 = sld [smem:[#allocation6 + $0x3]]
        %v231 = vstv %s230
        %v232 = vmul.f32 %v209, %v231
        %v233 = vmul.f32 %v229, %v232
        %s234 = scalar_lea.vmem %s192, 6 [#allocation7]
        %235 = vst [vmem:[%s234] sm:$0x3] %v233
        %s236 = sand.u32 %s91, 1
        %s237 = scalar_lea.sflag [#allocation4], %s236
        %s238 = sand.u32 %s91, 1
        %s239 = smul.addr %s238, 8
        %s240 = scalar_lea.vmem [#allocation7], %s239
        // Predicated region
        $region37: #{tpu_custom_call.1} parent=27 // pred_check
          %p241 = pneg %p101
        $region38: #{tpu_custom_call.1} parent=27 // pred_check_branch
          %243 = sbr.rel (%p241) target = $region40
        $region39: #{tpu_custom_call.1} parent=27 // pred_region
          %s245 = ssub.s32 128, 128
          %246 = vsyncadd %s237, %s245
          %s247 = smul.addr %s24, 4
          %s248 = sadd.s32 %s25, %s247
          %s249 = smul.addr %s248, 32
          %s250 = scalar_lea.hbm %s2, %s249
          %s251 = sshll.u32 %s240, 4
          %s252 = int_to_ptr.vmem [resolvable:$true] %s251
          %257 = dma.vmem_to_hbm [thread:$0]  %s252, 128, %s250, %s237, 32, 32, 2
        $region40: #{tpu_custom_call.1} parent=27 // pred_fallthru
          _
      $region28: #{tpu_custom_call.1} parent=5 // pred_fallthru
        _
      %p258 = scmp.le.s32.totalorder 2, %s15
      // Predicated region
      $region41: #{tpu_custom_call.1} parent=5 // pred_check
        %p259 = pneg %p258
      $region42: #{tpu_custom_call.1} parent=5 // pred_check_branch
        %261 = sbr.rel (%p259) target = $region44
      $region43: #{tpu_custom_call.1} parent=5 // pred_region
        %s262 = ssub.s32 %s15, 2
        // Predicated region
        $region45: #{tpu_custom_call.1} parent=43 // pred_check
          %p263 = pneg %p107
        $region46: #{tpu_custom_call.1} parent=43 // pred_check_branch
          %265 = sbr.rel (%p263) target = $region48
        $region47: #{tpu_custom_call.1} parent=43 // pred_region
          %s266 = sand.u32 %s92, 1
          %s267 = scalar_lea.sflag [#allocation4], %s266
          %s268 = sand.u32 %s92, 1
          %s269 = smul.addr %s268, 8
          %s270 = scalar_lea.vmem [#allocation7], %s269
          %271 = dma.done %s267, 128
        $region48: #{tpu_custom_call.1} parent=43 // pred_fallthru
          _
      $region44: #{tpu_custom_call.1} parent=5 // pred_fallthru
        _
    $region6: #{tpu_custom_call.1} parent=1 // loop_footer
      %s19 = sadd.s32 1, %s15
    $region7: #{tpu_custom_call.1} parent=1 // loop_footer_branch
      %14 = sbr.rel target = $region3
    $region8: #{tpu_custom_call.1} parent=1 // loop_exit
      _
    %272 = vsyncpa [#allocation3], 1
    %s273 = scalar_lea.sflag [#allocation3], 1
    %274 = vsyncpa %s273, 1
    %275 = vsyncpa [#allocation4], 1
    %s276 = scalar_lea.sflag [#allocation4], 1
    %277 = vsyncpa %s276, 1
    %278 = vsyncpa [#allocation5], 1
    %s279 = scalar_lea.sflag [#allocation5], 1
    %280 = vsyncpa %s279, 1

</llo_original>
